<compile_context>
chip_gen: v5e
topology: v5e:2x2
jax: 0.10.0
libtpu: 0.0.40
codegen_flags: <defaults>
</compile_context>

<pallas_src>
import jax
import jax.numpy as jnp
from jax.experimental import pallas as pl
from jax.experimental.pallas import tpu as pltpu


_LANES = 128
_D_CHUNK = 512  # lanes of D reduced per step; keeps the x*w temp tiny


def _round_up(x, m):
    return (x + m - 1) // m * m


def _cdiv(a, b):
    return (a + b - 1) // b


def _critic_kernel(x_ref, w_ref, b_ref, o_ref):
    # x_ref: (TB, D)            input dtype, streamed / double-buffered
    # w_ref: (1, D)             f32, resident (constant index_map)
    # b_ref: (1, 1)             f32, SMEM scalar
    # o_ref: (1, TB//128, 128)  f32, sublane x lane dense output tile
    TB, D = x_ref.shape
    SG = TB // _LANES
    acc = jnp.zeros((SG, _LANES), jnp.float32)
    off = 0
    # Static (trace-time) chunking over D: VPU multiply + lane-reduce per
    # chunk, so only a (SG, 128, dc) temp is live instead of a full (TB, D)
    # product buffer.
    while off < D:
        dc = min(_D_CHUNK, D - off)
        xc = x_ref[:, off:off + dc].reshape(SG, _LANES, dc).astype(jnp.float32)
        wc = w_ref[:, off:off + dc].reshape(1, 1, dc)
        acc = acc + jnp.sum(xc * wc, axis=-1)
        off += dc
    o_ref[...] = (acc + b_ref[0, 0]).reshape(1, SG, _LANES)


def _feudal_critic_pallas(x2d, weight, bias, *, tile_bytes_target=4 << 20,
                          max_tile_rows=None, vmem_cap_bytes=40 << 20):
    """x2d: (B, D) -> (B,) f32 values via the Pallas kernel."""
    B, D = x2d.shape
    in_itemsize = x2d.dtype.itemsize

    # Tiny batches: pad rows up to one 128-row tile (negligible copy). Larger
    # batches are NOT padded; the partial last tile reads past the end of x
    # and those garbage rows are dropped by the final [:B] slice.
    B_eff = _round_up(B, _LANES) if B < _LANES else B
    if B_eff != B:
        x2d = jnp.pad(x2d, ((0, B_eff - B), (0, 0)))

    # Row-tile size: per-tile byte target (>= ~2 MiB reaches HBM roofline),
    # multiple of 128, never larger than the 128-aligned batch (so blocks stay
    # inside the array except for the standard partial last tile), and small
    # enough that v7x's two TensorCores both get work when the batch allows.
    tb = max(_LANES,
             (tile_bytes_target // max(1, D * in_itemsize)) // _LANES * _LANES)
    if max_tile_rows is not None:
        tb = min(tb, max(_LANES, max_tile_rows // _LANES * _LANES))
    tb = min(tb, max(_LANES, (B_eff // _LANES) * _LANES))
    if B_eff >= 2 * _LANES:
        tb = min(tb, max(_LANES, _round_up(_cdiv(B_eff, 2), _LANES)))
    TB = int(tb)
    SG = TB // _LANES
    num_tiles = _cdiv(B_eff, TB)

    dc = min(_D_CHUNK, D)
    # VMEM accounting: double-buffered x stream + per-chunk product temp +
    # acc/output + resident weight (plus slack).
    vmem_need = (2 * TB * D * in_itemsize + TB * dc * 4
                 + 4 * TB * 4 + 2 * D * 4)
    vmem_limit = int(min(max(int(vmem_need * 1.5) + (1 << 20), 16 << 20),
                         vmem_cap_bytes))

    w_row = weight.reshape(1, D).astype(jnp.float32)
    b_sc = bias.reshape(1, 1).astype(jnp.float32)

    out = pl.pallas_call(
        _critic_kernel,
        out_shape=jax.ShapeDtypeStruct((num_tiles, SG, _LANES), jnp.float32),
        grid=(num_tiles,),
        in_specs=[
            pl.BlockSpec((TB, D), lambda i: (i, 0)),               # x row tiles
            pl.BlockSpec((1, D), lambda i: (0, 0)),                # weight (resident)
            pl.BlockSpec(memory_space=pltpu.MemorySpace.SMEM),     # bias scalar
        ],
        out_specs=pl.BlockSpec((1, SG, _LANES), lambda i: (i, 0, 0)),
        compiler_params=pltpu.CompilerParams(
            dimension_semantics=("parallel",),
            vmem_limit_bytes=vmem_limit,
        ),
        cost_estimate=pl.CostEstimate(
            flops=2 * B_eff * D,
            transcendentals=0,
            bytes_accessed=B_eff * D * in_itemsize + D * 4 + B_eff * 4,
        ),
    )(x2d, w_row, b_sc)

    return out.reshape(num_tiles * TB)[:B]


def feudal_critic_forward(inputs, weight, bias, *, min_pallas_bytes=0,
                          tile_bytes_target=4 << 20, max_tile_rows=None):
    """FeUdalCritic.forward: value = Linear(input_shape, 1)(inputs).

    inputs: (..., D)   (any leading batch dims, native dtype preserved)
    weight: (1, D)     (PyTorch nn.Linear layout: (out_features, in_features))
    bias:   (1,)
    returns: (..., 1) in the input dtype
    """
    orig_shape = inputs.shape
    D = orig_shape[-1]
    x2d = inputs.reshape(-1, D)          # native dtype; upcast happens per tile
    B = x2d.shape[0]
    in_itemsize = x2d.dtype.itemsize

    # Fall back to plain XLA when the problem is too tiny to amortize a kernel
    # launch, or so D-heavy that even a single 128-row double-buffered tile
    # would not fit VMEM (would need a D-tiled accumulator grid instead).
    too_small = B * D * in_itemsize < min_pallas_bytes
    too_wide = (2 * _LANES * D * in_itemsize
                + _LANES * min(_D_CHUNK, D) * 4) > (48 << 20)
    if too_small or too_wide:
        out = (x2d.astype(jnp.float32)
               @ weight.reshape(1, D).astype(jnp.float32).T
               + bias.reshape(1).astype(jnp.float32))
        return out.astype(inputs.dtype).reshape(orig_shape[:-1] + (1,))

    vals = _feudal_critic_pallas(x2d, weight, bias,
                                 tile_bytes_target=tile_bytes_target,
                                 max_tile_rows=max_tile_rows)
    return vals.astype(inputs.dtype).reshape(orig_shape[:-1] + (1,))


def init_feudal_critic_params(key, input_shape):
    """Deterministic init mirroring nn.Linear(input_shape, 1) shapes."""
    k_w, k_b = jax.random.split(key)
    bound = 1.0 / jnp.sqrt(jnp.float32(input_shape))
    weight = jax.random.uniform(
        k_w, (1, input_shape), jnp.float32, minval=-bound, maxval=bound)
    bias = jax.random.uniform(
        k_b, (1,), jnp.float32, minval=-bound, maxval=bound)
    return weight, bias


if __name__ == "__main__":
    key = jax.random.PRNGKey(0)
    k_in, k_in2, k_param = jax.random.split(key, 3)

    # Small shapes consistent with the module: (batch, n_agents, input_shape)
    batch, n_agents, input_shape = 2, 4, 32
    inputs = jax.random.normal(k_in, (batch, n_agents, input_shape), jnp.float32)
    weight, bias = init_feudal_critic_params(k_param, input_shape)

    value = feudal_critic_forward(inputs, weight, bias)
    value = jax.block_until_ready(value)
    ref = inputs @ weight.T + bias
    assert value.shape == (batch, n_agents, 1)
    assert jnp.allclose(value, ref, atol=1e-5, rtol=1e-5)

    # Multi-tile, ragged-batch path: B = 300 rows, TB forced to 128 -> 3 tiles
    # with a partial last tile and no host-side padding of x.
    inputs2 = jax.random.normal(k_in2, (3, 100, input_shape), jnp.float32)
    value2 = feudal_critic_forward(inputs2, weight, bias, max_tile_rows=128)
    value2 = jax.block_until_ready(value2)
    ref2 = inputs2 @ weight.T + bias
    assert value2.shape == (3, 100, 1)
    assert jnp.allclose(value2, ref2, atol=1e-5, rtol=1e-5)

    print("KERNEL_OK")
</pallas_src>

<mosaic_0001>
module attributes {stable_mosaic.version = 11 : i64} {
  func.func @_critic_kernel(%arg0: i32, %arg1: memref<128x32xf32, #tpu.memory_space<vmem>>, %arg2: memref<1x32xf32, #tpu.memory_space<vmem>>, %arg3: memref<1x1xf32, #tpu.memory_space<smem>>, %arg4: memref<1x1x128xf32, #tpu.memory_space<vmem>>) attributes {dimension_semantics = [#tpu.dimension_semantics<parallel>], iteration_bounds = array<i64: 1>, scalar_prefetch = 0 : i64, scratch_operands = 0 : i64, tpu.core_type = #tpu.core_type<tc>, window_params = [{transform_indices = @transform_0, window_bounds = array<i64: 128, 32>}, {pipeline_mode = #tpu.pipeline_mode<synchronous>, transform_indices = @transform_1, window_bounds = array<i64: 1, 32>}, {transform_indices = @transform_2, window_bounds = array<i64: 1, 1>}, {transform_indices = @transform_3, window_bounds = array<i64: 1, 1, 128>}]} {
    %cst = arith.constant 0.000000e+00 : f32
    %0 = vector.broadcast %cst : f32 to vector<1x128xf32>
    %c0 = arith.constant 0 : index
    %c0_0 = arith.constant 0 : index
    %1 = vector.load %arg1[%c0, %c0_0] : memref<128x32xf32, #tpu.memory_space<vmem>>, vector<128x32xf32>
    %2 = vector.shape_cast %1 : vector<128x32xf32> to vector<1x128x32xf32>
    %c0_1 = arith.constant 0 : index
    %c0_2 = arith.constant 0 : index
    %3 = vector.load %arg2[%c0_1, %c0_2] : memref<1x32xf32, #tpu.memory_space<vmem>>, vector<1x32xf32>
    %4 = vector.shape_cast %3 : vector<1x32xf32> to vector<1x1x32xf32>
    %5 = vector.broadcast %4 : vector<1x1x32xf32> to vector<1x128x32xf32>
    %6 = arith.mulf %2, %5 : vector<1x128x32xf32>
    %cst_3 = arith.constant dense<0.000000e+00> : vector<1x128xf32>
    %7 = vector.multi_reduction <add>, %6, %cst_3 [2] : vector<1x128x32xf32> to vector<1x128xf32>
    %8 = arith.addf %0, %7 : vector<1x128xf32>
    %c0_4 = arith.constant 0 : index
    %c0_5 = arith.constant 0 : index
    %9 = memref.load %arg3[%c0_4, %c0_5] : memref<1x1xf32, #tpu.memory_space<smem>>
    %10 = vector.broadcast %9 : f32 to vector<1x128xf32>
    %11 = arith.addf %8, %10 : vector<1x128xf32>
    %12 = vector.shape_cast %11 : vector<1x128xf32> to vector<1x1x128xf32>
    %c0_6 = arith.constant 0 : index
    %c0_7 = arith.constant 0 : index
    %c0_8 = arith.constant 0 : index
    %13 = vector.load %arg4[%c0_6, %c0_7, %c0_8] : memref<1x1x128xf32, #tpu.memory_space<vmem>>, vector<1x1x128xf32>
    tpu.vector_store %arg4[%c0_6, %c0_7, %c0_8], %12 {strides = array<i32>} : memref<1x1x128xf32, #tpu.memory_space<vmem>>, vector<1x1x128xf32>,
    return
  }
  func.func @transform_0(%arg0: i32) -> (i32, i32) {
    %c0_i32 = arith.constant 0 : i32
    %c0_i32_0 = arith.constant 0 : i32
    return %arg0, %c0_i32 : i32, i32
  }
  func.func @transform_1(%arg0: i32) -> (i32, i32) {
    %c0_i32 = arith.constant 0 : i32
    %c0_i32_0 = arith.constant 0 : i32
    %c0_i32_1 = arith.constant 0 : i32
    return %c0_i32, %c0_i32_0 : i32, i32
  }
  func.func @transform_2(%arg0: i32) -> (i32, i32) {
    %c0_i32 = arith.constant 0 : i32
    %c0_i32_0 = arith.constant 0 : i32
    %c0_i32_1 = arith.constant 0 : i32
    return %c0_i32, %c0_i32_0 : i32, i32
  }
  func.func @transform_3(%arg0: i32) -> (i32, i32, i32) {
    %c0_i32 = arith.constant 0 : i32
    %c0_i32_0 = arith.constant 0 : i32
    %c0_i32_1 = arith.constant 0 : i32
    return %arg0, %c0_i32, %c0_i32_0 : i32, i32, i32
  }
}

</mosaic_0001>

<llo_original>
// kernel: tpu_custom_call.1
$region0: #{tpu_custom_call.1}
  #allocation0 [shape = 'u32[]', space=smem, size = 0x4, offset = 0x4, fixed_abs, tag = 'smem constant byte address 0x4 - core index']
  #allocation1 [shape = 'u32[72,128]{1,0:T(1,128)}', space=vmem, size = 0x9000, scoped, tag = 'internal scratch']
  #allocation2 [shape = 'f32[1,1]{1,0:T(1,128)S(6)}', space=smem, size = 0x200, scoped, tag = 'scoped memory for tpu_custom_call.1']
  %s0 = inlined_call_operand.vmem [shape: f32[128,32], index: 0, kind: input, shape index: {}]
  %s1 = inlined_call_operand.vmem [shape: f32[1,32], index: 1, kind: input, shape index: {}]
  %s2 = inlined_call_operand.<no memory space> [shape: f32[1,1], index: 2, kind: input, shape index: {}]
  %s3 = inlined_call_operand.hbm [shape: f32[1,1,128], index: 3, kind: output, shape index: {}]
  %s4 = sld [smem:[#allocation0]]
  $region22: #{tpu_custom_call.1} parent=0
    _
  %s6 = ssub.s32 1, %s4
  %s7 = scalar_select 0, %s6, %s4
  %8 = sst [smem:[#allocation2]] %s2
  $region1: #{tpu_custom_call.1} parent=0
    #allocation3 [shape = 'u8[512]{0}', space=vmem, size = 0x400, scoped, tag = 'output window, operand 0, single buffered']
    #allocation4 [shape = 's32[1]{0}', space=sflag, size = 0x4, scoped, tag = 'scoped memory for tpu_custom_call.1']
    %9 = vsyncpa [#allocation4], 0
    // Predicated region
    $region2: #{tpu_custom_call.1} parent=1 // pred_check
      _
    $region3: #{tpu_custom_call.1} parent=1 // pred_check_branch
      %11 = sbr.rel (0) target = $region5
    $region4: #{tpu_custom_call.1} parent=1 // pred_region
      _
    $region5: #{tpu_custom_call.1} parent=1 // pred_fallthru
      _
    // Predicated region
    $region6: #{tpu_custom_call.1} parent=1 // pred_check
      _
    $region7: #{tpu_custom_call.1} parent=1 // pred_check_branch
      %13 = sbr.rel (0) target = $region9
    $region8: #{tpu_custom_call.1} parent=1 // pred_region
      _
    $region9: #{tpu_custom_call.1} parent=1 // pred_fallthru
      _
    // Predicated region
    $region10: #{tpu_custom_call.1} parent=1 // pred_check
      _
    $region11: #{tpu_custom_call.1} parent=1 // pred_check_branch
      %15 = sbr.rel (0) target = $region13
    $region12: #{tpu_custom_call.1} parent=1 // pred_region
      _
    $region13: #{tpu_custom_call.1} parent=1 // pred_fallthru
      _
    %v16 = vld [vmem:[%s0] sm:$0xff]
    %v17 = vld [vmem:[%s0 + $0x8] sm:$0xff]
    %v18 = vld [vmem:[%s0 + $0x10] sm:$0xff]
    %v19 = vld [vmem:[%s0 + $0x18] sm:$0xff]
    %v20 = vld [vmem:[%s0 + $0x20] sm:$0xff]
    %v21 = vld [vmem:[%s0 + $0x28] sm:$0xff]
    %v22 = vld [vmem:[%s0 + $0x30] sm:$0xff]
    %v23 = vld [vmem:[%s0 + $0x38] sm:$0xff]
    %v24 = vld [vmem:[%s0 + $0x40] sm:$0xff]
    %v25 = vld [vmem:[%s0 + $0x48] sm:$0xff]
    %v26 = vld [vmem:[%s0 + $0x50] sm:$0xff]
    %v27 = vld [vmem:[%s0 + $0x58] sm:$0xff]
    %v28 = vld [vmem:[%s0 + $0x60] sm:$0xff]
    %v29 = vld [vmem:[%s0 + $0x68] sm:$0xff]
    %v30 = vld [vmem:[%s0 + $0x70] sm:$0xff]
    %v31 = vld [vmem:[%s0 + $0x78] sm:$0xff]
    %v32 = vld [vmem:[%s1] sm:$0x1]
    %v34 = vperm.slane %v32, 0
    %v36 = vmul.f32 %v16, %v34
    %v37 = vmul.f32 %v17, %v34
    %v38 = vmul.f32 %v18, %v34
    %v39 = vmul.f32 %v19, %v34
    %v40 = vmul.f32 %v20, %v34
    %v41 = vmul.f32 %v21, %v34
    %v42 = vmul.f32 %v22, %v34
    %v43 = vmul.f32 %v23, %v34
    %v44 = vmul.f32 %v24, %v34
    %v45 = vmul.f32 %v25, %v34
    %v46 = vmul.f32 %v26, %v34
    %v47 = vmul.f32 %v27, %v34
    %v48 = vmul.f32 %v28, %v34
    %v49 = vmul.f32 %v29, %v34
    %v50 = vmul.f32 %v30, %v34
    %v51 = vmul.f32 %v31, %v34
    %vm52 = vcmask 261120
    %v53 = vsel %vm52, %v36, 0.0
    %54 = vadd.xlane.f32.xlu0 %v53
    %v55 = vpop.xlane.xlu0 %54
    %v56 = vsel %vm52, %v37, 0.0
    %57 = vadd.xlane.f32.xlu0 %v56
    %v58 = vpop.xlane.xlu0 %57
    %v59 = vsel %vm52, %v38, 0.0
    %60 = vadd.xlane.f32.xlu0 %v59
    %v61 = vpop.xlane.xlu0 %60
    %v62 = vsel %vm52, %v39, 0.0
    %63 = vadd.xlane.f32.xlu0 %v62
    %v64 = vpop.xlane.xlu0 %63
    %v65 = vsel %vm52, %v40, 0.0
    %66 = vadd.xlane.f32.xlu0 %v65
    %v67 = vpop.xlane.xlu0 %66
    %v68 = vsel %vm52, %v41, 0.0
    %69 = vadd.xlane.f32.xlu0 %v68
    %v70 = vpop.xlane.xlu0 %69
    %v71 = vsel %vm52, %v42, 0.0
    %72 = vadd.xlane.f32.xlu0 %v71
    %v73 = vpop.xlane.xlu0 %72
    %v74 = vsel %vm52, %v43, 0.0
    %75 = vadd.xlane.f32.xlu0 %v74
    %v76 = vpop.xlane.xlu0 %75
    %v77 = vsel %vm52, %v44, 0.0
    %78 = vadd.xlane.f32.xlu0 %v77
    %v79 = vpop.xlane.xlu0 %78
    %v80 = vsel %vm52, %v45, 0.0
    %81 = vadd.xlane.f32.xlu0 %v80
    %v82 = vpop.xlane.xlu0 %81
    %v83 = vsel %vm52, %v46, 0.0
    %84 = vadd.xlane.f32.xlu0 %v83
    %v85 = vpop.xlane.xlu0 %84
    %v86 = vsel %vm52, %v47, 0.0
    %87 = vadd.xlane.f32.xlu0 %v86
    %v88 = vpop.xlane.xlu0 %87
    %v89 = vsel %vm52, %v48, 0.0
    %90 = vadd.xlane.f32.xlu0 %v89
    %v91 = vpop.xlane.xlu0 %90
    %v92 = vsel %vm52, %v49, 0.0
    %93 = vadd.xlane.f32.xlu0 %v92
    %v94 = vpop.xlane.xlu0 %93
    %v95 = vsel %vm52, %v50, 0.0
    %96 = vadd.xlane.f32.xlu0 %v95
    %v97 = vpop.xlane.xlu0 %96
    %v98 = vsel %vm52, %v51, 0.0
    %99 = vadd.xlane.f32.xlu0 %v98
    %v100 = vpop.xlane.xlu0 %99
    %v101 = vadd.f32 %v55, 0.0
    %v102 = vadd.f32 %v58, 0.0
    %v103 = vadd.f32 %v61, 0.0
    %v104 = vadd.f32 %v64, 0.0
    %v105 = vadd.f32 %v67, 0.0
    %v106 = vadd.f32 %v70, 0.0
    %v107 = vadd.f32 %v73, 0.0
    %v108 = vadd.f32 %v76, 0.0
    %v109 = vadd.f32 %v79, 0.0
    %v110 = vadd.f32 %v82, 0.0
    %v111 = vadd.f32 %v85, 0.0
    %v112 = vadd.f32 %v88, 0.0
    %v113 = vadd.f32 %v91, 0.0
    %v114 = vadd.f32 %v94, 0.0
    %v115 = vadd.f32 %v97, 0.0
    %v116 = vadd.f32 %v100, 0.0
    %s117 = sld [smem:[#allocation2]]
    %v118 = vstv %s117
    %v119 = vadd.f32 %v101, %v118
    %v120 = vadd.f32 %v102, %v118
    %v121 = vadd.f32 %v103, %v118
    %v122 = vadd.f32 %v104, %v118
    %v123 = vadd.f32 %v105, %v118
    %v124 = vadd.f32 %v106, %v118
    %v125 = vadd.f32 %v107, %v118
    %v126 = vadd.f32 %v108, %v118
    %v127 = vadd.f32 %v109, %v118
    %v128 = vadd.f32 %v110, %v118
    %v129 = vadd.f32 %v111, %v118
    %v130 = vadd.f32 %v112, %v118
    %v131 = vadd.f32 %v113, %v118
    %v132 = vadd.f32 %v114, %v118
    %v133 = vadd.f32 %v115, %v118
    %v134 = vadd.f32 %v116, %v118
    %v151 = vlaneseq
    %v152 = vand.u32 %v151, 127
    %v153 = vperm.slane %v119, %v152
    %v154 = vadd.s32 %v152, 4294967288
    %v155 = vperm.slane %v120, %v154
    %vm156 = vcmask 130112
    %v157 = vsel %vm156, %v155, %v153
    %v158 = vadd.s32 %v152, 4294967280
    %v159 = vperm.slane %v121, %v158
    %vm160 = vcmask 195712
    %v161 = vsel %vm160, %v159, %v157
    %v162 = vadd.s32 %v152, 4294967272
    %v163 = vperm.slane %v122, %v162
    %vm164 = vcmask 261312
    %v165 = vsel %vm164, %v163, %v161
    %v166 = vadd.s32 %v152, 4294967264
    %v167 = vperm.slane %v123, %v166
    %vm168 = vcmask 326912
    %v169 = vsel %vm168, %v167, %v165
    %v170 = vadd.s32 %v152, 4294967256
    %v171 = vperm.slane %v124, %v170
    %vm172 = vcmask 392512
    %v173 = vsel %vm172, %v171, %v169
    %v174 = vadd.s32 %v152, 4294967248
    %v175 = vperm.slane %v125, %v174
    %vm176 = vcmask 458112
    %v177 = vsel %vm176, %v175, %v173
    %v178 = vadd.s32 %v152, 4294967240
    %v179 = vperm.slane %v126, %v178
    %vm180 = vcmask 523712
    %v181 = vsel %vm180, %v179, %v177
    %v182 = vadd.s32 %v152, 4294967232
    %v183 = vperm.slane %v127, %v182
    %vm184 = vcmask 589312
    %v185 = vsel %vm184, %v183, %v181
    %v186 = vadd.s32 %v152, 4294967224
    %v187 = vperm.slane %v128, %v186
    %vm188 = vcmask 654912
    %v189 = vsel %vm188, %v187, %v185
    %v190 = vadd.s32 %v152, 4294967216
    %v191 = vperm.slane %v129, %v190
    %vm192 = vcmask 720512
    %v193 = vsel %vm192, %v191, %v189
    %v194 = vadd.s32 %v152, 4294967208
    %v195 = vperm.slane %v130, %v194
    %vm196 = vcmask 786112
    %v197 = vsel %vm196, %v195, %v193
    %v198 = vadd.s32 %v152, 4294967200
    %v199 = vperm.slane %v131, %v198
    %vm200 = vcmask 851712
    %v201 = vsel %vm200, %v199, %v197
    %v202 = vadd.s32 %v152, 4294967192
    %v203 = vperm.slane %v132, %v202
    %vm204 = vcmask 917312
    %v205 = vsel %vm204, %v203, %v201
    %v206 = vadd.s32 %v152, 4294967184
    %v207 = vperm.slane %v133, %v206
    %vm208 = vcmask 982912
    %v209 = vsel %vm208, %v207, %v205
    %v210 = vadd.s32 %v152, 4294967176
    %v211 = vperm.slane %v134, %v210
    %vm212 = vcmask 1048512
    %v213 = vsel %vm212, %v211, %v209
    %215 = vst [vmem:[#allocation3] sm:$0x1] %v213
    // Predicated region
    $region14: #{tpu_custom_call.1} parent=1 // pred_check
      _
    $region15: #{tpu_custom_call.1} parent=1 // pred_check_branch
      %217 = sbr.rel (0) target = $region17
    $region16: #{tpu_custom_call.1} parent=1 // pred_region
      %219 = vsyncadd [#allocation4], 0
      %s221 = sshll.u32 [#allocation3], 4
      %s222 = int_to_ptr.vmem [resolvable:$true] %s221
      %s223 = sshll.u32 %s3, 4
      %s224 = int_to_ptr.hbm [resolvable:$true] %s223
      %226 = dma.vmem_to_hbm [thread:$0]  %s222, 16, %s224, [#allocation4]
    $region17: #{tpu_custom_call.1} parent=1 // pred_fallthru
      _
    // Predicated region
    $region18: #{tpu_custom_call.1} parent=1 // pred_check
      _
    $region19: #{tpu_custom_call.1} parent=1 // pred_check_branch
      %228 = sbr.rel (0) target = $region21
    $region20: #{tpu_custom_call.1} parent=1 // pred_region
      %230 = dma.done [#allocation4], 16
    $region21: #{tpu_custom_call.1} parent=1 // pred_fallthru
      _
    %231 = vsyncpa [#allocation4], 1

</llo_original>
